<compile_context>
chip_gen: v6e
topology: v6e:2x2x1
jax: 0.10.0
libtpu: 0.0.40
codegen_flags: <defaults>
</compile_context>

<pallas_src>
import functools

import jax
import jax.numpy as jnp
from jax import lax
from jax.experimental import pallas as pl
from jax.experimental.pallas import tpu as pltpu


def _scaled_l2norm_kernel(x_ref, s_ref, o_ref, *, eps):
    """x_ref: (Bn, C, T)   s_ref: (1, C, 1)   o_ref: (Bn, C, T)."""
    x = x_ref[...].astype(jnp.float32)                       # upcast (bf16 safe)
    ss = jnp.sum(x * x, axis=1, keepdims=True)               # (Bn, 1, T) over C
    # F.normalize clamps ||x|| at eps before dividing; clamping ||x||^2 at
    # eps^2 (a normal f32) is equivalent and lets one EUP rsqrt replace
    # sqrt + full-precision divide.
    inv = lax.rsqrt(jnp.maximum(ss, eps * eps))
    y = x * inv * s_ref[...].astype(jnp.float32)             # per-channel scale
    o_ref[...] = y.astype(o_ref.dtype)


# ~2 MiB per block: with double-buffered input + output that is ~8 MiB of
# scoped VMEM, comfortably inside v5e's 16 MiB default, v6e/v7x's 32 MiB.
_BLOCK_BUDGET_BYTES = 2 * 1024 * 1024
_MIN_GRID_STEPS = 8


def _pick_tiles(N, C, HW, itemsize):
    """Choose (Bn, T) so blocks are ~_BLOCK_BUDGET_BYTES and lane-aligned."""
    # Spatial (lane) tile: multiple of 128 unless the whole extent is smaller.
    if HW < 128:
        T = HW
    else:
        max_lanes = max(128, (_BLOCK_BUDGET_BYTES // (C * itemsize)) // 128 * 128)
        hw_ceil = -(-HW // 128) * 128
        T = min(max_lanes, hw_ceil)
    s_tiles = -(-HW // T)  # cdiv: ragged last tile handled by Pallas

    # Batch tile: grow the block toward the byte budget, but keep enough grid
    # steps (>= 8 when available) for megacore sharding / DMA overlap.
    block_bytes = max(C * T * itemsize, 1)
    Bn = int(max(1, min(N, _BLOCK_BUDGET_BYTES // block_bytes)))
    target_steps = min(_MIN_GRID_STEPS, N * s_tiles)
    while Bn > 1 and (-(-N // Bn)) * s_tiles < target_steps:
        Bn -= 1
    return Bn, T, s_tiles


def scaled_l2norm(x, scale, eps=1e-12):
    """x: (N, C, H, W) float, scale: (C,) -> (N, C, H, W) in x.dtype."""
    N, C, H, W = x.shape
    HW = H * W
    itemsize = jnp.dtype(x.dtype).itemsize
    Bn, T, s_tiles = _pick_tiles(N, C, HW, itemsize)
    n_tiles = -(-N // Bn)

    x_flat = x.reshape(N, C, HW)                 # contiguous: no data movement
    s3 = scale.reshape(1, C, 1).astype(jnp.float32)

    cost = pl.CostEstimate(
        flops=4 * N * C * HW,
        transcendentals=N * HW,
        bytes_accessed=2 * N * C * HW * itemsize + C * 4,
    )

    out = pl.pallas_call(
        functools.partial(_scaled_l2norm_kernel, eps=float(eps)),
        out_shape=jax.ShapeDtypeStruct((N, C, HW), x.dtype),
        grid=(n_tiles, s_tiles),
        in_specs=[
            pl.BlockSpec((Bn, C, T), lambda n, j: (n, 0, j)),
            pl.BlockSpec((1, C, 1), lambda n, j: (0, 0, 0)),
        ],
        out_specs=pl.BlockSpec((Bn, C, T), lambda n, j: (n, 0, j)),
        compiler_params=pltpu.CompilerParams(
            dimension_semantics=("parallel", "parallel")),
        cost_estimate=cost,
    )(x_flat, s3)
    return out.reshape(N, C, H, W)


if __name__ == "__main__":
    key = jax.random.PRNGKey(0)
    N, C, H, W = 2, 8, 16, 16
    initial_scale = 20.0          # reset_parameters(): scale.fill_(initial_scale)

    x = jax.random.normal(key, (N, C, H, W), jnp.float32)
    scale = jnp.full((C,), initial_scale, jnp.float32)

    out = jax.jit(scaled_l2norm)(x, scale)
    out = jax.block_until_ready(out)

    # Reference: F.normalize(x, p=2, dim=1) * scale[None, :, None, None]
    norm = jnp.sqrt(jnp.sum(x * x, axis=1, keepdims=True))
    ref = x / jnp.maximum(norm, 1e-12) * scale[None, :, None, None]

    assert out.shape == (N, C, H, W), out.shape
    assert bool(jnp.all(jnp.isfinite(out)))
    assert bool(jnp.allclose(out, ref, atol=1e-5, rtol=1e-5)), float(
        jnp.max(jnp.abs(out - ref)))
    print("KERNEL_OK")
</pallas_src>

<mosaic_0001>
module attributes {stable_mosaic.version = 11 : i64} {
  func.func @_scaled_l2norm_kernel(%arg0: i32, %arg1: i32, %arg2: memref<1x8x256xf32, #tpu.memory_space<vmem>>, %arg3: memref<1x8x1xf32, #tpu.memory_space<vmem>>, %arg4: memref<1x8x256xf32, #tpu.memory_space<vmem>>) attributes {dimension_semantics = [#tpu.dimension_semantics<parallel>, #tpu.dimension_semantics<parallel>], iteration_bounds = array<i64: 2, 1>, scalar_prefetch = 0 : i64, scratch_operands = 0 : i64, tpu.core_type = #tpu.core_type<tc>, window_params = [{transform_indices = @transform_0, window_bounds = array<i64: 1, 8, 256>}, {pipeline_mode = #tpu.pipeline_mode<synchronous>, transform_indices = @transform_1, window_bounds = array<i64: 1, 8, 1>}, {transform_indices = @transform_2, window_bounds = array<i64: 1, 8, 256>}]} {
    %c0 = arith.constant 0 : index
    %c0_0 = arith.constant 0 : index
    %c0_1 = arith.constant 0 : index
    %0 = vector.load %arg2[%c0, %c0_0, %c0_1] : memref<1x8x256xf32, #tpu.memory_space<vmem>>, vector<1x8x256xf32>
    %1 = arith.mulf %0, %0 : vector<1x8x256xf32>
    %cst = arith.constant dense<0.000000e+00> : vector<1x256xf32>
    %2 = vector.multi_reduction <add>, %1, %cst [1] : vector<1x8x256xf32> to vector<1x256xf32>
    %3 = vector.shape_cast %2 : vector<1x256xf32> to vector<1x1x256xf32>
    %cst_2 = arith.constant 1.000000e-24 : f32
    %4 = vector.broadcast %cst_2 : f32 to vector<1x1x256xf32>
    %5 = arith.maximumf %3, %4 : vector<1x1x256xf32>
    %6 = math.rsqrt %5 : vector<1x1x256xf32>
    %7 = vector.broadcast %6 : vector<1x1x256xf32> to vector<1x8x256xf32>
    %8 = arith.mulf %0, %7 : vector<1x8x256xf32>
    %c0_3 = arith.constant 0 : index
    %c0_4 = arith.constant 0 : index
    %c0_5 = arith.constant 0 : index
    %9 = vector.load %arg3[%c0_3, %c0_4, %c0_5] : memref<1x8x1xf32, #tpu.memory_space<vmem>>, vector<1x8x1xf32>
    %10 = vector.broadcast %9 : vector<1x8x1xf32> to vector<1x8x256xf32>
    %11 = arith.mulf %8, %10 : vector<1x8x256xf32>
    %c0_6 = arith.constant 0 : index
    %c0_7 = arith.constant 0 : index
    %c0_8 = arith.constant 0 : index
    %12 = vector.load %arg4[%c0_6, %c0_7, %c0_8] : memref<1x8x256xf32, #tpu.memory_space<vmem>>, vector<1x8x256xf32>
    tpu.vector_store %arg4[%c0_6, %c0_7, %c0_8], %11 {strides = array<i32>} : memref<1x8x256xf32, #tpu.memory_space<vmem>>, vector<1x8x256xf32>,
    return
  }
  func.func @transform_0(%arg0: i32, %arg1: i32) -> (i32, i32, i32) {
    %c0_i32 = arith.constant 0 : i32
    %c0_i32_0 = arith.constant 0 : i32
    return %arg0, %c0_i32, %arg1 : i32, i32, i32
  }
  func.func @transform_1(%arg0: i32, %arg1: i32) -> (i32, i32, i32) {
    %c0_i32 = arith.constant 0 : i32
    %c0_i32_0 = arith.constant 0 : i32
    %c0_i32_1 = arith.constant 0 : i32
    %c0_i32_2 = arith.constant 0 : i32
    return %c0_i32, %c0_i32_0, %c0_i32_1 : i32, i32, i32
  }
  func.func @transform_2(%arg0: i32, %arg1: i32) -> (i32, i32, i32) {
    %c0_i32 = arith.constant 0 : i32
    %c0_i32_0 = arith.constant 0 : i32
    return %arg0, %c0_i32, %arg1 : i32, i32, i32
  }
}

</mosaic_0001>

<llo_original>
// kernel: scaled_l2norm.1
$region0: #{scaled_l2norm.1}
  #allocation0 [shape = 'u32[]', space=smem, size = 0x4, offset = 0x4, fixed_abs, tag = 'smem constant byte address 0x4 - core index']
  #allocation1 [shape = 'u32[144,128]{1,0:T(1,128)}', space=vmem, size = 0x12000, scoped, tag = 'internal scratch']
  %s0 = inlined_call_operand.vmem [shape: f32[2,8,256], index: 0, kind: input, shape index: {}]
  %s1 = inlined_call_operand.vmem [shape: f32[1,8,1], index: 1, kind: input, shape index: {}]
  %s2 = inlined_call_operand.vmem [shape: f32[2,8,256], index: 2, kind: output, shape index: {}]
  %s3 = sld [smem:[#allocation0]]
  $region41: #{scaled_l2norm.1} parent=0
    _
  %s5 = ssub.s32 1, %s3
  %s6 = scalar_select 0, %s5, %s3
  loop: start=0, step=1, limit=4
  $region2: #{scaled_l2norm.1} parent=0 // loop_pre_header
    _
  $region3: #{scaled_l2norm.1} parent=0 // loop_header
    %s8 = sphi 0, %s12
    %p9 = scmp.ge.s32.totalorder %s8, 4
    %s15 = sphi 0, %s27
    %s16 = sphi 0, %s23
    %s17 = sphi 0, %s15
    %s18 = sphi 0, %s16
    %s19 = sphi 0, %s17
    %s20 = sphi 0, %s18
    %s32 = sphi 0, %s34
    %s35 = sphi 0, %s32
    %s36 = sphi 0, %s35
    %s52 = sphi 0, %s36
    %s56 = sphi 0, %s56
    %s58 = sphi 0, %s56
    %s59 = sphi 0, %s58
    %s73 = sphi 0, %s59
    %s81 = sphi 0, %s83
    %s84 = sphi 0, %s81
    %s85 = sphi 0, %s84
    %s101 = sphi 0, %s85
  $region4: #{scaled_l2norm.1} parent=0 // loop_header_branch
    %11 = sbr.rel (%p9) target = $region8
  $region5: #{scaled_l2norm.1} parent=0 // loop_body
    %s13 = ssub.s32 %s8, 1
    %s14 = ssub.s32 %s8, 2
    %s21 = sadd.s32 1, %s16
    %p22 = scmp.ge.s32.totalorder %s21, 1
    %s23 = scalar_select %p22, 0, %s21
    %s24 = sadd.s32 1, %s15
    %s25 = scalar_select %p22, %s24, %s15
    %p26 = scmp.ge.s32.totalorder %s25, 2
    %s27 = scalar_select %p26, 0, %s25
    %s28 = ssub.s32 %s15, %s27
    %s29 = ssub.s32 %s16, %s23
    %s30 = sor.u32 %s28, %s29
    %p31 = scmp.eq.s32.totalorder %s30, 0
    %s33 = sadd.s32 %s32, 1
    %s34 = scalar_select %p31, %s32, %s33
    %p37 = pneg %p31
    %p38 = scmp.eq.s32.totalorder %s8, 1
    %p39 = por %p37, %p38
    %p40 = scmp.ne.s32.totalorder %s32, %s35
    %p41 = scmp.eq.s32.totalorder %s8, 0
    %p42 = por %p40, %p41
    %p43 = scmp.ne.s32.totalorder %s32, %s35
    %p44 = scmp.eq.s32.totalorder %s13, 1
    %p45 = por %p43, %p44
    %p46 = scmp.ne.s32.totalorder %s35, %s36
    %p47 = scmp.eq.s32.totalorder %s13, 0
    %p48 = por %p46, %p47
    %p49 = scmp.ne.s32.totalorder %s35, %s36
    %p50 = scmp.eq.s32.totalorder %s14, 1
    %p51 = por %p49, %p50
    %p53 = scmp.ne.s32.totalorder %s36, %s52
    %p54 = scmp.eq.s32.totalorder %s14, 0
    %p55 = por %p53, %p54
    %s57 = sadd.s32 %s56, 1
    %p60 = scmp.eq.s32.totalorder %s8, 1
    %p61 = scmp.ne.s32.totalorder %s56, %s58
    %p62 = scmp.eq.s32.totalorder %s8, 0
    %p63 = por %p61, %p62
    %p64 = scmp.ne.s32.totalorder %s56, %s58
    %p65 = scmp.eq.s32.totalorder %s13, 1
    %p66 = por %p64, %p65
    %p67 = scmp.ne.s32.totalorder %s58, %s59
    %p68 = scmp.eq.s32.totalorder %s13, 0
    %p69 = por %p67, %p68
    %p70 = scmp.ne.s32.totalorder %s58, %s59
    %p71 = scmp.eq.s32.totalorder %s14, 1
    %p72 = por %p70, %p71
    %p74 = scmp.ne.s32.totalorder %s59, %s73
    %p75 = scmp.eq.s32.totalorder %s14, 0
    %p76 = por %p74, %p75
    %s77 = ssub.s32 %s15, %s27
    %s78 = ssub.s32 %s16, %s23
    %s79 = sor.u32 %s77, %s78
    %p80 = scmp.eq.s32.totalorder %s79, 0
    %s82 = sadd.s32 %s81, 1
    %s83 = scalar_select %p80, %s81, %s82
    %p86 = pneg %p80
    %p87 = scmp.eq.s32.totalorder %s8, 1
    %p88 = por %p86, %p87
    %p89 = scmp.ne.s32.totalorder %s81, %s84
    %p90 = scmp.eq.s32.totalorder %s8, 0
    %p91 = por %p89, %p90
    %p92 = scmp.ne.s32.totalorder %s81, %s84
    %p93 = scmp.eq.s32.totalorder %s13, 1
    %p94 = por %p92, %p93
    %p95 = scmp.ne.s32.totalorder %s84, %s85
    %p96 = scmp.eq.s32.totalorder %s13, 0
    %p97 = por %p95, %p96
    %p98 = scmp.ne.s32.totalorder %s84, %s85
    %p99 = scmp.eq.s32.totalorder %s14, 1
    %p100 = por %p98, %p99
    %p102 = scmp.ne.s32.totalorder %s85, %s101
    %p103 = scmp.eq.s32.totalorder %s14, 0
    %p104 = por %p102, %p103
    %p105 = scmp.le.s32.totalorder 1, %s8
    %p106 = scmp.lt.s32.totalorder %s8, 3
    %p107 = pnand %p105, %p106
    %p108 = pneg %p107
    // Predicated region
    $region9: #{scaled_l2norm.1} parent=5 // pred_check
      _
    $region10: #{scaled_l2norm.1} parent=5 // pred_check_branch
      %110 = sbr.rel (%p107) target = $region12
    $region11: #{scaled_l2norm.1} parent=5 // pred_region
      %s111 = ssub.s32 %s8, 1
      // Predicated region
      $region13: #{scaled_l2norm.1} parent=11 // pred_check
        %p112 = pneg %p69
      $region14: #{scaled_l2norm.1} parent=11 // pred_check_branch
        %114 = sbr.rel (%p112) target = $region16
      $region15: #{scaled_l2norm.1} parent=11 // pred_region
        _
      $region16: #{scaled_l2norm.1} parent=11 // pred_fallthru
        _
    $region12: #{scaled_l2norm.1} parent=5 // pred_fallthru
      _
    %p115 = scmp.lt.s32.totalorder %s8, 2
    // Predicated region
    $region17: #{scaled_l2norm.1} parent=5 // pred_check
      %p116 = pneg %p115
    $region18: #{scaled_l2norm.1} parent=5 // pred_check_branch
      %118 = sbr.rel (%p116) target = $region20
    $region19: #{scaled_l2norm.1} parent=5 // pred_region
      // Predicated region
      $region21: #{scaled_l2norm.1} parent=19 // pred_check
        %p119 = pneg %p42
      $region22: #{scaled_l2norm.1} parent=19 // pred_check_branch
        %121 = sbr.rel (%p119) target = $region24
      $region23: #{scaled_l2norm.1} parent=19 // pred_region
        %s122 = smul.u32 2, %s16
        %p123 = scmp.lt.s32.totalorder %s15, 1
        %s124 = scalar_select %p123, %s15, 1
        %p125 = scmp.lt.s32.totalorder %s122, 1
        %s126 = scalar_select %p125, %s122, 1
        %s127 = smul.addr %s124, 2
        %s128 = sadd.s32 %s126, %s127
        %s129 = smul.addr %s128, 8
        %s130 = scalar_lea.vmem %s0, %s129
        %s131 = smul.u32 2, %s16
      $region24: #{scaled_l2norm.1} parent=19 // pred_fallthru
        _
    $region20: #{scaled_l2norm.1} parent=5 // pred_fallthru
      _
    %p132 = scmp.le.s32.totalorder 1, %s8
    %p133 = scmp.lt.s32.totalorder %s8, 3
    %p134 = pnand %p132, %p133
    %p135 = pneg %p134
    // Predicated region
    $region25: #{scaled_l2norm.1} parent=5 // pred_check
      _
    $region26: #{scaled_l2norm.1} parent=5 // pred_check_branch
      %137 = sbr.rel (%p134) target = $region28
    $region27: #{scaled_l2norm.1} parent=5 // pred_region
      %s138 = ssub.s32 %s8, 1
      %s139 = smul.u32 2, %s18
      %p140 = scmp.lt.s32.totalorder %s17, 1
      %s141 = scalar_select %p140, %s17, 1
      %p142 = scmp.lt.s32.totalorder %s139, 1
      %s143 = scalar_select %p142, %s139, 1
      %s144 = smul.addr %s141, 2
      %s145 = sadd.s32 %s143, %s144
      %s146 = smul.addr %s145, 8
      %s147 = scalar_lea.vmem %s0, %s146
      %p148 = pneg %p48
      %p149 = pneg %p45
      %p150 = pneg %p69
      %p151 = pneg %p66
      %p152 = pneg %p97
      %p153 = pneg %p94
      %s154 = smul.u32 2, %s18
      %p155 = scmp.lt.s32.totalorder %s17, 1
      %s156 = scalar_select %p155, %s17, 1
      %p157 = scmp.lt.s32.totalorder %s154, 1
      %s158 = scalar_select %p157, %s154, 1
      %s159 = smul.addr %s156, 2
      %s160 = sadd.s32 %s158, %s159
      %s161 = smul.addr %s160, 8
      %s162 = scalar_lea.vmem %s2, %s161
      %s163 = smul.u32 2, %s18
      %p164 = scmp.lt.s32.totalorder %s17, 1
      %s165 = scalar_select %p164, %s17, 1
      %p166 = scmp.lt.s32.totalorder %s163, 1
      %s167 = scalar_select %p166, %s163, 1
      %s168 = smul.addr %s165, 2
      %s169 = sadd.s32 %s167, %s168
      %s170 = smul.addr %s169, 8
      %s171 = scalar_lea.vmem %s0, %s170
      %s172 = smul.u32 2, %s18
      %s173 = smul.u32 2, %s18
      %p174 = scmp.lt.s32.totalorder %s17, 1
      %s175 = scalar_select %p174, %s17, 1
      %p176 = scmp.lt.s32.totalorder %s173, 1
      %s177 = scalar_select %p176, %s173, 1
      %s178 = smul.addr %s175, 2
      %s179 = sadd.s32 %s177, %s178
      %s180 = smul.addr %s179, 8
      %s181 = scalar_lea.vmem %s2, %s180
      %s182 = smul.u32 2, %s18
      %v183 = vld [vmem:[%s171] sm:$0xff]
      %v184 = vld [vmem:[%s171 + $0x8] sm:$0xff]
      %v185 = vmul.f32 %v183, %v183
      %v186 = vmul.f32 %v184, %v184
      %v187 = vrot.slane %v185, 4
      %v188 = vadd.f32 %v185, %v187
      %v189 = vrot.slane %v188, 2
      %v190 = vadd.f32 %v188, %v189
      %v191 = vrot.slane %v190, 1
      %v192 = vadd.f32 %v190, %v191
      %v193 = vrot.slane %v186, 4
      %v194 = vadd.f32 %v186, %v193
      %v195 = vrot.slane %v194, 2
      %v196 = vadd.f32 %v194, %v195
      %v197 = vrot.slane %v196, 1
      %v198 = vadd.f32 %v196, %v197
      %v199 = vmax.f32 %v192, 1e-24
      %v200 = vmax.f32 %v198, 1e-24
      %v201 = vrsqrt.pop %v199
      %v202 = vrsqrt.pop %v200
      %v203 = vmul.f32 %v183, %v201
      %v204 = vmul.f32 %v184, %v202
      %v205 = vld [vmem:[%s1] sm:$0xff]
      %207 = vset.pattern.permute.xlu0 0
      %208 = vperm.xlu0 %207, %v205
      %v209 = vpop.permute.xlu0 %208
      %v211 = vmul.f32 %v203, %v209
      %v212 = vmul.f32 %v204, %v209
      %213 = vst [vmem:[%s181] sm:$0xff] %v211
      %214 = vst [vmem:[%s181 + $0x8] sm:$0xff] %v212
      %s215 = smul.u32 2, %s18
      %p216 = scmp.lt.s32.totalorder %s17, 1
      %s217 = scalar_select %p216, %s17, 1
      %p218 = scmp.lt.s32.totalorder %s215, 1
      %s219 = scalar_select %p218, %s215, 1
      %s220 = smul.addr %s217, 2
      %s221 = sadd.s32 %s219, %s220
      %s222 = smul.addr %s221, 8
      %s223 = scalar_lea.vmem %s2, %s222
      // Predicated region
      $region29: #{scaled_l2norm.1} parent=27 // pred_check
        %p224 = pneg %p94
      $region30: #{scaled_l2norm.1} parent=27 // pred_check_branch
        %226 = sbr.rel (%p224) target = $region32
      $region31: #{scaled_l2norm.1} parent=27 // pred_region
        %s227 = smul.u32 2, %s18
      $region32: #{scaled_l2norm.1} parent=27 // pred_fallthru
        _
    $region28: #{scaled_l2norm.1} parent=5 // pred_fallthru
      _
    %p228 = scmp.le.s32.totalorder 2, %s8
    // Predicated region
    $region33: #{scaled_l2norm.1} parent=5 // pred_check
      %p229 = pneg %p228
    $region34: #{scaled_l2norm.1} parent=5 // pred_check_branch
      %231 = sbr.rel (%p229) target = $region36
    $region35: #{scaled_l2norm.1} parent=5 // pred_region
      %s232 = ssub.s32 %s8, 2
      // Predicated region
      $region37: #{scaled_l2norm.1} parent=35 // pred_check
        %p233 = pneg %p100
      $region38: #{scaled_l2norm.1} parent=35 // pred_check_branch
        %235 = sbr.rel (%p233) target = $region40
      $region39: #{scaled_l2norm.1} parent=35 // pred_region
        %s236 = smul.u32 2, %s20
        %p237 = scmp.lt.s32.totalorder %s19, 1
        %s238 = scalar_select %p237, %s19, 1
        %p239 = scmp.lt.s32.totalorder %s236, 1
        %s240 = scalar_select %p239, %s236, 1
        %s241 = smul.addr %s238, 2
        %s242 = sadd.s32 %s240, %s241
        %s243 = smul.addr %s242, 8
        %s244 = scalar_lea.vmem %s2, %s243
      $region40: #{scaled_l2norm.1} parent=35 // pred_fallthru
        _
    $region36: #{scaled_l2norm.1} parent=5 // pred_fallthru
      _
  $region6: #{scaled_l2norm.1} parent=0 // loop_footer
    %s12 = sadd.s32 1, %s8
  $region7: #{scaled_l2norm.1} parent=0 // loop_footer_branch
    %7 = sbr.rel target = $region3
  $region8: #{scaled_l2norm.1} parent=0 // loop_exit
    _

</llo_original>
